<compile_context>
chip_gen: v6e
topology: v6e:2x2x1
jax: 0.10.0
libtpu: 0.0.40
codegen_flags: <defaults>
</compile_context>

<pallas_src>
import functools

import jax
import jax.numpy as jnp
from jax.experimental import pallas as pl
from jax.experimental.pallas import tpu as pltpu

_LANE = 128
_SUBLANE = 8


def _linear_kernel(x_ref, w_ref, b_ref, o_ref):
    # x_ref: (TM, D), w_ref: (D, T), b_ref: (1, T), o_ref: (TM, T)
    acc = jnp.dot(x_ref[...], w_ref[...], preferred_element_type=jnp.float32)
    o_ref[...] = (acc + b_ref[...]).astype(o_ref.dtype)


def _vmem_footprint(rows, cols, itemsize):
    """VMEM bytes of a (rows, cols) tile after (8, 128) layout padding."""
    r = ((rows + _SUBLANE - 1) // _SUBLANE) * _SUBLANE
    c = ((cols + _LANE - 1) // _LANE) * _LANE
    return r * c * itemsize


def _pick_batch_tile(D, T, itemsize, *, budget_bytes=16 << 20, tm_max=8192):
    """Largest TM (multiple of 8, <= tm_max) whose double-buffered x+out tiles
    fit the VMEM budget."""
    per_row = (((D + _LANE - 1) // _LANE) * _LANE
               + ((T + _LANE - 1) // _LANE) * _LANE) * itemsize
    tm = budget_bytes // (2 * per_row)
    tm = max(_SUBLANE, min(tm_max, (tm // _SUBLANE) * _SUBLANE))
    return int(tm)


def prepare_params(weight, bias):
    """One-time parameter prep (transpose only; no lane padding needed since the
    kernel now writes the narrow (B, T) output directly).

    weight: (T, D) float32  (PyTorch nn.Linear convention)
    bias:   (T,)   float32
    """
    T, D = weight.shape
    return jnp.asarray(weight).T, jnp.asarray(bias).reshape(1, T), T


def personality_regressor(x, w_t, b2, num_traits, *, use_bf16_stream=False):
    """y = x @ W^T + b.

    x:   (B, D)
    w_t: (D, T)  pre-transposed weight
    b2:  (1, T)  bias
    returns (B, T) in x's dtype (f32 in the default path).
    """
    B, D = x.shape
    T = w_t.shape[1]
    assert T == num_traits

    out_dtype = x.dtype
    itemsize = jnp.dtype(x.dtype).itemsize

    cost = pl.CostEstimate(
        flops=2 * B * D * T,
        transcendentals=0,
        bytes_accessed=(B * D + D * T + T + B * T) * itemsize,
    )

    # ---- small path: no grid, no pipeline machinery -------------------------
    small_bytes = (_vmem_footprint(B, D, itemsize)
                   + _vmem_footprint(B, T, itemsize)
                   + _vmem_footprint(D, T, itemsize))
    if small_bytes <= (8 << 20):  # well inside v5e's 16 MiB scoped default
        return pl.pallas_call(
            _linear_kernel,
            out_shape=jax.ShapeDtypeStruct((B, T), out_dtype),
            in_specs=[
                pl.BlockSpec(memory_space=pltpu.MemorySpace.VMEM),
                pl.BlockSpec(memory_space=pltpu.MemorySpace.VMEM),
                pl.BlockSpec(memory_space=pltpu.MemorySpace.VMEM),
            ],
            out_specs=pl.BlockSpec(memory_space=pltpu.MemorySpace.VMEM),
            cost_estimate=cost,
        )(x, w_t, b2)

    # ---- large-B path: batch-tiled grid, W/b resident, narrow output --------
    if use_bf16_stream:
        # Halves the dominant HBM read of x; f32 accumulation in the MXU.
        x = x.astype(jnp.bfloat16)
        w_t = w_t.astype(jnp.bfloat16)

    TM = _pick_batch_tile(D, T, jnp.dtype(x.dtype).itemsize)
    TM = min(TM, ((B + _SUBLANE - 1) // _SUBLANE) * _SUBLANE)
    grid = (pl.cdiv(B, TM),)  # ragged last block handled by Pallas (no jnp.pad copy)

    # Generation-aware VMEM request: actual tile bytes + margin, capped so v7x
    # (64 MiB/TC) keeps headroom; v5e/v6e have 128 MiB physical so this is safe.
    x_item = jnp.dtype(x.dtype).itemsize
    needed = (2 * (_vmem_footprint(TM, D, x_item) + _vmem_footprint(TM, T, itemsize))
              + _vmem_footprint(D, T, x_item) + _vmem_footprint(1, T, itemsize))
    vmem_limit = int(min(max(needed + (8 << 20), 32 << 20), 48 << 20))

    y = pl.pallas_call(
        _linear_kernel,
        out_shape=jax.ShapeDtypeStruct((B, T), out_dtype),
        grid=grid,
        in_specs=[
            pl.BlockSpec((TM, D), lambda i: (i, 0)),
            pl.BlockSpec((D, T), lambda i: (0, 0)),   # resident across the grid
            pl.BlockSpec((1, T), lambda i: (0, 0)),   # resident across the grid
        ],
        out_specs=pl.BlockSpec((TM, T), lambda i: (i, 0)),
        compiler_params=pltpu.CompilerParams(
            dimension_semantics=("parallel",),
            vmem_limit_bytes=vmem_limit,
        ),
        cost_estimate=cost,
    )(x, w_t, b2)
    return y


if __name__ == "__main__":
    key = jax.random.PRNGKey(0)
    k_x, k_w, k_b = jax.random.split(key, 3)

    batch = 2
    input_dim = 32
    num_traits = 5

    x = jax.random.normal(k_x, (batch, input_dim), dtype=jnp.float32)
    # Deterministic "init" of the nn.Linear parameters (synthetic, not a checkpoint).
    weight = jax.random.normal(k_w, (num_traits, input_dim), dtype=jnp.float32) * 0.1
    bias = jax.random.normal(k_b, (num_traits,), dtype=jnp.float32) * 0.1

    # One-time parameter prep (transpose) -- amortized across calls.
    w_t, b2, T = prepare_params(weight, bias)

    fwd = jax.jit(functools.partial(personality_regressor, num_traits=T))
    y = fwd(x, w_t, b2)
    y = jax.block_until_ready(y)

    # Correctness check against a pure-JAX reference of nn.Linear.
    y_ref = x @ weight.T + bias
    assert y.shape == (batch, num_traits)
    assert jnp.allclose(y, y_ref, atol=1e-5, rtol=1e-5)

    # Exercise the tiled large-B path as well (B not a multiple of TM -> ragged
    # last block handled without any jnp.pad copy).
    big_B = 20000
    xb = jax.random.normal(k_x, (big_B, input_dim), dtype=jnp.float32)
    yb = jax.block_until_ready(fwd(xb, w_t, b2))
    yb_ref = xb @ weight.T + bias
    assert yb.shape == (big_B, num_traits)
    assert jnp.allclose(yb, yb_ref, atol=1e-4, rtol=1e-4)

    print("KERNEL_OK")
</pallas_src>

<mosaic_0001>
module attributes {stable_mosaic.version = 11 : i64} {
  func.func @_linear_kernel(%arg0: memref<2x32xf32, #tpu.memory_space<vmem>>, %arg1: memref<32x5xf32, #tpu.memory_space<vmem>>, %arg2: memref<1x5xf32, #tpu.memory_space<vmem>>, %arg3: memref<2x5xf32, #tpu.memory_space<vmem>>) attributes {dimension_semantics = [], scalar_prefetch = 0 : i64, scratch_operands = 0 : i64, tpu.core_type = #tpu.core_type<tc>} {
    %c0 = arith.constant 0 : index
    %c0_0 = arith.constant 0 : index
    %0 = vector.load %arg0[%c0, %c0_0] : memref<2x32xf32, #tpu.memory_space<vmem>>, vector<2x32xf32>
    %c0_1 = arith.constant 0 : index
    %c0_2 = arith.constant 0 : index
    %1 = vector.load %arg1[%c0_1, %c0_2] : memref<32x5xf32, #tpu.memory_space<vmem>>, vector<32x5xf32>
    %cst = arith.constant dense<0.000000e+00> : vector<2x5xf32>
    %2 = tpu.matmul %0, %1, %cst {dimension_numbers = #tpu.dot_dimension_numbers<[1], [0], [0], [1], [0, 0, 1, 1], [], []>} : vector<2x32xf32>, vector<32x5xf32>, vector<2x5xf32> -> vector<2x5xf32>
    %c0_3 = arith.constant 0 : index
    %c0_4 = arith.constant 0 : index
    %3 = vector.load %arg2[%c0_3, %c0_4] : memref<1x5xf32, #tpu.memory_space<vmem>>, vector<1x5xf32>
    %4 = vector.broadcast %3 : vector<1x5xf32> to vector<2x5xf32>
    %5 = arith.addf %2, %4 : vector<2x5xf32>
    %c0_5 = arith.constant 0 : index
    %c0_6 = arith.constant 0 : index
    %6 = vector.load %arg3[%c0_5, %c0_6] : memref<2x5xf32, #tpu.memory_space<vmem>>, vector<2x5xf32>
    tpu.vector_store %arg3[%c0_5, %c0_6], %5 {strides = array<i32>} : memref<2x5xf32, #tpu.memory_space<vmem>>, vector<2x5xf32>,
    return
  }
}

</mosaic_0001>

<llo_original>
// kernel: personality_regressor.1
$region0: #{personality_regressor.1}
  #allocation0 [shape = 'u32[]', space=smem, size = 0x4, offset = 0x4, fixed_abs, tag = 'smem constant byte address 0x4 - core index']
  #allocation1 [shape = 'u32[144,128]{1,0:T(1,128)}', space=vmem, size = 0x12000, scoped, tag = 'internal scratch']
  %s0 = inlined_call_operand.vmem [shape: f32[2,32], index: 0, kind: input, shape index: {}]
  %s1 = inlined_call_operand.vmem [shape: f32[32,5], index: 1, kind: input, shape index: {}]
  %s2 = inlined_call_operand.vmem [shape: f32[1,5], index: 2, kind: input, shape index: {}]
  %s3 = inlined_call_operand.hbm [shape: f32[2,5], index: 3, kind: output, shape index: {}]
  %s4 = sld [smem:[#allocation0]]
  $region22: #{personality_regressor.1} parent=0
    _
  %s6 = ssub.s32 1, %s4
  %s7 = scalar_select 0, %s6, %s4
  $region1: #{personality_regressor.1} parent=0
    #allocation2 [shape = 'u8[1024]{0}', space=vmem, size = 0x400, scoped, tag = 'output window, operand 0, single buffered']
    #allocation3 [shape = 's32[1]{0}', space=sflag, size = 0x4, scoped, tag = 'scoped memory for personality_regressor.1']
    %8 = vsyncpa [#allocation3], 0
    // Predicated region
    $region2: #{personality_regressor.1} parent=1 // pred_check
      _
    $region3: #{personality_regressor.1} parent=1 // pred_check_branch
      %10 = sbr.rel (0) target = $region5
    $region4: #{personality_regressor.1} parent=1 // pred_region
      _
    $region5: #{personality_regressor.1} parent=1 // pred_fallthru
      _
    // Predicated region
    $region6: #{personality_regressor.1} parent=1 // pred_check
      _
    $region7: #{personality_regressor.1} parent=1 // pred_check_branch
      %12 = sbr.rel (0) target = $region9
    $region8: #{personality_regressor.1} parent=1 // pred_region
      _
    $region9: #{personality_regressor.1} parent=1 // pred_fallthru
      _
    // Predicated region
    $region10: #{personality_regressor.1} parent=1 // pred_check
      _
    $region11: #{personality_regressor.1} parent=1 // pred_check_branch
      %14 = sbr.rel (0) target = $region13
    $region12: #{personality_regressor.1} parent=1 // pred_region
      _
    $region13: #{personality_regressor.1} parent=1 // pred_fallthru
      _
    %v15 = vld [vmem:[%s0] sm:$0x3]
    %v16 = vld [vmem:[%s1] sm:$0xff]
    %v17 = vld [vmem:[%s1 + $0x8] sm:$0xff]
    %v18 = vld [vmem:[%s1 + $0x10] sm:$0xff]
    %v19 = vld [vmem:[%s1 + $0x18] sm:$0xff]
    %v20 = vld [vmem:[%s2] sm:$0x1]
    %v22 = vlaneseq
    %v23 = vshrl.u32 %v22, 7
    %v24 = vsub.s32 0, %v23
    %v25 = vrot.slane %v20, %v24
    %vm27 = vcmask 261120
    %v29 = vsel %vm27, %v15, 0
    %31 = vmatprep.subr.mxu0 0.0
    %32 = vmatpush1.msra.mxu0 0.0
    %33 = vmatprep.subr.mxu0 0.0
    %34 = vmatpush1.msra.mxu0 0.0
    %35 = vmatprep.subr.mxu0 0.0
    %36 = vmatpush1.msra.mxu0 0.0
    %37 = vmatprep.subr.mxu0 0.0
    %38 = vmatpush1.msra.mxu0 0.0
    %39 = vmatprep.subr.mxu0 0.0
    %40 = vmatpush1.msra.mxu0 0.0
    %41 = vmatprep.subr.mxu0 0.0
    %42 = vmatpush1.msra.mxu0 0.0
    %43 = vmatprep.subr.mxu0 0.0
    %44 = vmatpush1.msra.mxu0 0.0
    %45 = vmatprep.subr.mxu0 0.0
    %46 = vmatpush1.msra.mxu0 0.0
    %47 = vmatprep.subr.mxu0 0.0
    %48 = vmatpush1.msra.mxu0 0.0
    %49 = vmatprep.subr.mxu0 0.0
    %50 = vmatpush1.msra.mxu0 0.0
    %51 = vmatprep.subr.mxu0 0.0
    %52 = vmatpush1.msra.mxu0 0.0
    %53 = vmatprep.subr.mxu0 0.0
    %54 = vmatpush1.msra.mxu0 0.0
    %55 = vmatprep.subr.mxu0 0.0
    %56 = vmatpush1.msra.mxu0 %v19
    %57 = vmatprep.subr.mxu0 0.0
    %58 = vmatpush1.msra.mxu0 %v18
    %59 = vmatprep.subr.mxu0 0.0
    %60 = vmatpush1.msra.mxu0 %v17
    %61 = vmatprep.subr.mxu0 0.0
    %62 = vmatpush1.msra.mxu0 %v16
    %63 = vmatprep.subr.mxu0 0.0
    %64 = vmatpush2.msra.mxu0 0.0
    %65 = vmatprep.subr.mxu0 0.0
    %66 = vmatpush2.msra.mxu0 0.0
    %67 = vmatprep.subr.mxu0 0.0
    %68 = vmatpush2.msra.mxu0 0.0
    %69 = vmatprep.subr.mxu0 0.0
    %70 = vmatpush2.msra.mxu0 0.0
    %71 = vmatprep.subr.mxu0 0.0
    %72 = vmatpush2.msra.mxu0 0.0
    %73 = vmatprep.subr.mxu0 0.0
    %74 = vmatpush2.msra.mxu0 0.0
    %75 = vmatprep.subr.mxu0 0.0
    %76 = vmatpush2.msra.mxu0 0.0
    %77 = vmatprep.subr.mxu0 0.0
    %78 = vmatpush2.msra.mxu0 0.0
    %79 = vmatprep.subr.mxu0 0.0
    %80 = vmatpush2.msra.mxu0 0.0
    %81 = vmatprep.subr.mxu0 0.0
    %82 = vmatpush2.msra.mxu0 0.0
    %83 = vmatprep.subr.mxu0 0.0
    %84 = vmatpush2.msra.mxu0 0.0
    %85 = vmatprep.subr.mxu0 0.0
    %86 = vmatpush2.msra.mxu0 0.0
    %87 = vmatprep.subr.mxu0 0.0
    %88 = vmatpush2.msra.mxu0 0.0
    %89 = vmatprep.subr.mxu0 0.0
    %90 = vmatpush2.msra.mxu0 0.0
    %91 = vmatprep.subr.mxu0 0.0
    %92 = vmatpush2.msra.mxu0 0.0
    %93 = vmatprep.subr.mxu0 0.0
    %94 = vmatpush2.msra.mxu0 0.0
    %95 = vmatprep.mubr.f32.mxu0 0.0
    %96 = vmatmul.mubr.f32.gmra.mxu0 %v29
    %v97 = vpop.f32.mrf.mxu0
    %v98 = vadd.f32 %v25, %v97
    %v99 = vpop.f32.mrf.mxu0
    %100 = vdwg.mxu0
    %vm101 = vcmask 33792
    %102 = vst.msk [vmem:[#allocation2] sm:$0x3] %vm101, %v98
    // Predicated region
    $region14: #{personality_regressor.1} parent=1 // pred_check
      _
    $region15: #{personality_regressor.1} parent=1 // pred_check_branch
      %104 = sbr.rel (0) target = $region17
    $region16: #{personality_regressor.1} parent=1 // pred_region
      %s106 = ssub.s32 32, 32
      %107 = vsyncadd [#allocation3], %s106
      %s109 = sshll.u32 [#allocation2], 4
      %s110 = int_to_ptr.vmem [resolvable:$true] %s109
      %112 = dma.vmem_to_hbm [thread:$0]  %s110, 32, %s3, [#allocation3]
    $region17: #{personality_regressor.1} parent=1 // pred_fallthru
      _
    // Predicated region
    $region18: #{personality_regressor.1} parent=1 // pred_check
      _
    $region19: #{personality_regressor.1} parent=1 // pred_check_branch
      %114 = sbr.rel (0) target = $region21
    $region20: #{personality_regressor.1} parent=1 // pred_region
      %115 = dma.done [#allocation3], 32
    $region21: #{personality_regressor.1} parent=1 // pred_fallthru
      _
    %116 = vsyncpa [#allocation3], 1

</llo_original>
